<compile_context>
chip_gen: v7x
topology: tpu7x:2x2x1
jax: 0.10.0
libtpu: 0.0.40
codegen_flags: <defaults>
</compile_context>

<pallas_src>
import functools

import jax
import jax.numpy as jnp
from jax.experimental import pallas as pl
from jax.experimental.pallas import tpu as pltpu


def _round_up(x, m):
    return ((x + m - 1) // m) * m


def backfunc_kernel(y_ref, w1_ref, b1_ref, w2_ref, w3_ref, o_ref):
    # y_ref:  (2, TB)   batch on the lane axis (lane-dense)
    # w1_ref: (HP, 2)   = W1^T, hidden zero-padded to HP
    # b1_ref: (HP, 1)   b1 plus the constant-1 channel at row `hid`
    # w2_ref: (HP, HP)  = W2^T with b2 folded into the constant-channel column
    # w3_ref: (HP, 2)   = W3 with b3 folded into the constant-channel row
    # o_ref:  (2, TB)
    yT = y_ref[...]                                     # (2, TB)
    w1t = w1_ref[...]                                   # (HP, 2)

    # --- Layer 1 (K=2): VPU broadcast-mul-add, no MXU --------------------
    h1 = w1t[:, 0:1] * yT[0:1, :] + w1t[:, 1:2] * yT[1:2, :] + b1_ref[...]
    h1 = jnp.maximum(h1, 0.0)                           # (HP, TB); row `hid` == 1

    # --- Layer 2 (50x50 padded to HPxHP): the only MXU matmul ------------
    # Precision pinned so the f32 reference tolerance (1e-5) is met on the
    # bf16-native MXU of v5e/v6e/v7x.
    h2 = jnp.dot(w2_ref[...], h1,
                 preferred_element_type=jnp.float32,
                 precision=jax.lax.Precision.HIGHEST)
    h2 = jnp.maximum(h2, 0.0)                           # (HP, TB); row `hid` == 1

    # --- Layer 3 (N=2): off the MXU. lane-broadcast mul + sublane reduce --
    w3c = w3_ref[...]                                   # (HP, 2)
    out0 = jnp.sum(h2 * w3c[:, 0:1], axis=0, keepdims=True)   # (1, TB)
    out1 = jnp.sum(h2 * w3c[:, 1:2], axis=0, keepdims=True)   # (1, TB)
    o_ref[...] = jnp.concatenate([out0, out1], axis=0).astype(o_ref.dtype)


def _pack_params(params, hid_pad):
    """Transpose + zero-pad parameters into the kernel layout, folding b2/b3
    into the weights via a constant-1 padded hidden channel."""
    w1, b1, w2, b2, w3, b3 = params                     # math layout: x @ W + b
    hid = w1.shape[1]
    const = hid                                         # index of constant-1 channel
    ph = hid_pad - hid

    w1t = jnp.pad(w1.T, ((0, ph), (0, 0)))              # (HP, 2)
    b1c = jnp.pad(b1.reshape(hid, 1), ((0, ph), (0, 0)))  # (HP, 1)
    b1c = b1c.at[const, 0].set(1.0)                     # constant channel: ReLU(1)=1

    w2t = jnp.pad(w2.T, ((0, ph), (0, ph)))             # (HP, HP) rows=out, cols=in
    w2t = w2t.at[:hid, const].set(b2.reshape(hid))      # fold b2
    w2t = w2t.at[const, const].set(1.0)                 # propagate constant channel

    w3c = jnp.pad(w3, ((0, ph), (0, 0)))                # (HP, 2) rows=hidden, cols=out
    w3c = w3c.at[const, :].set(b3.reshape(w3.shape[1])) # fold b3

    return w1t, b1c, w2t, w3c


@functools.partial(jax.jit, static_argnums=(2, 3))
def _forward_impl(y, params, block_b, hid_pad):
    hid = params[0].shape[1]
    hid_pad = max(hid_pad, _round_up(hid + 1, 8))       # +1 for the constant channel
    w1t, b1c, w2t, w3c = _pack_params(params, hid_pad)

    B = y.shape[0]
    # Batch tile: lane-multiple of 128, at most block_b, and small enough that
    # large batches produce >= 4 grid steps (v7x 2-TC megacore load balance).
    tb = min(block_b, max(128, _round_up(-(-B // 4), 128)))
    b_pad = _round_up(B, tb)

    # Lane-dense input slab: (2, B_pad), batch on the lane axis (fused by jit).
    yT = jnp.pad(y.T.astype(jnp.float32), ((0, 0), (0, b_pad - B)))

    # VMEM budget: double-buffered (2,tb) in/out tiles, h1/h2 temporaries, and
    # the resident (double-buffered) weight blocks, with 2x headroom.
    io_bytes = 2 * 2 * (2 * tb * 4)
    act_bytes = 2 * hid_pad * tb * 4
    w_bytes = 2 * 4 * hid_pad * (2 + 1 + hid_pad + 2)
    vmem_limit = int(min(48 << 20, max(32 << 20, 2 * (io_bytes + act_bytes + w_bytes))))

    # Weights/biases: full-array blocks with constant index maps -> resident.
    resident = lambda a: pl.BlockSpec(a.shape, lambda i: (0, 0))

    outT = pl.pallas_call(
        backfunc_kernel,
        out_shape=jax.ShapeDtypeStruct((2, b_pad), jnp.float32),
        grid=(b_pad // tb,),
        in_specs=[
            pl.BlockSpec((2, tb), lambda i: (0, i)),    # y tile (lane-dense)
            resident(w1t), resident(b1c), resident(w2t), resident(w3c),
        ],
        out_specs=pl.BlockSpec((2, tb), lambda i: (0, i)),
        compiler_params=pltpu.CompilerParams(
            dimension_semantics=("parallel",),          # megacore split on v7x
            vmem_limit_bytes=vmem_limit),
    )(yT, w1t, b1c, w2t, w3c)

    return outT[:, :B].T                                # back to (B, 2)


def backfunc_forward(t, y, params, *, block_b=16384, hid_pad=64):
    """Pallas forward pass. `t` is unused, matching the PyTorch signature."""
    del t
    return _forward_impl(y, params, int(block_b), int(hid_pad))


def init_params(key):
    # Matches the module's init: weights ~ N(0, 0.1), biases = 0.
    k1, k2, k3 = jax.random.split(key, 3)
    w1 = (0.1 * jax.random.normal(k1, (2, 50))).astype(jnp.float32)
    w2 = (0.1 * jax.random.normal(k2, (50, 50))).astype(jnp.float32)
    w3 = (0.1 * jax.random.normal(k3, (50, 2))).astype(jnp.float32)
    b1 = jnp.zeros((1, 50), jnp.float32)
    b2 = jnp.zeros((1, 50), jnp.float32)
    b3 = jnp.zeros((1, 2), jnp.float32)
    return (w1, b1, w2, b2, w3, b3)


def backfunc_ref(t, y, params):
    # Pure-JAX reference. Precision pinned to HIGHEST so it reproduces the
    # exact-f32 PyTorch semantics (the TPU default matmul precision is reduced).
    del t
    w1, b1, w2, b2, w3, b3 = params
    hi = jax.lax.Precision.HIGHEST
    h1 = jnp.maximum(jnp.dot(y, w1, precision=hi) + b1, 0.0)
    h2 = jnp.maximum(jnp.dot(h1, w2, precision=hi) + b2, 0.0)
    return jnp.dot(h2, w3, precision=hi) + b3


if __name__ == "__main__":
    key = jax.random.PRNGKey(0)
    kp, kt, ky = jax.random.split(key, 3)

    params = init_params(kp)

    # Small test matching the module interface: forward(t, y) with y (B, 2).
    batch = 8
    t = jax.random.uniform(kt, (batch,), dtype=jnp.float32)   # unused by forward
    y = jax.random.normal(ky, (batch, 2), dtype=jnp.float32)

    out = jax.block_until_ready(backfunc_forward(t, y, params))
    ref = backfunc_ref(t, y, params)
    assert out.shape == (batch, 2)
    assert jnp.allclose(out, ref, atol=1e-5, rtol=1e-5)

    # Second check: batch not a multiple of the tile + multi-tile grid path.
    batch2 = 300
    y2 = jax.random.normal(jax.random.PRNGKey(1), (batch2, 2), dtype=jnp.float32)
    out2 = jax.block_until_ready(backfunc_forward(None, y2, params, block_b=128))
    ref2 = backfunc_ref(None, y2, params)
    assert out2.shape == (batch2, 2)
    assert jnp.allclose(out2, ref2, atol=1e-5, rtol=1e-5)

    print("KERNEL_OK")
</pallas_src>

<mosaic_0001>
module attributes {stable_mosaic.version = 11 : i64} {
  func.func @backfunc_kernel(%arg0: i32, %arg1: memref<2x128xf32, #tpu.memory_space<vmem>>, %arg2: memref<64x2xf32, #tpu.memory_space<vmem>>, %arg3: memref<64x1xf32, #tpu.memory_space<vmem>>, %arg4: memref<64x64xf32, #tpu.memory_space<vmem>>, %arg5: memref<64x2xf32, #tpu.memory_space<vmem>>, %arg6: memref<2x128xf32, #tpu.memory_space<vmem>>) attributes {dimension_semantics = [#tpu.dimension_semantics<parallel>], iteration_bounds = array<i64: 1>, scalar_prefetch = 0 : i64, scratch_operands = 0 : i64, tpu.core_type = #tpu.core_type<tc>, window_params = [{transform_indices = @transform_0, window_bounds = array<i64: 2, 128>}, {pipeline_mode = #tpu.pipeline_mode<synchronous>, transform_indices = @transform_1, window_bounds = array<i64: 64, 2>}, {pipeline_mode = #tpu.pipeline_mode<synchronous>, transform_indices = @transform_2, window_bounds = array<i64: 64, 1>}, {pipeline_mode = #tpu.pipeline_mode<synchronous>, transform_indices = @transform_3, window_bounds = array<i64: 64, 64>}, {pipeline_mode = #tpu.pipeline_mode<synchronous>, transform_indices = @transform_4, window_bounds = array<i64: 64, 2>}, {transform_indices = @transform_5, window_bounds = array<i64: 2, 128>}]} {
    %c0 = arith.constant 0 : index
    %c0_0 = arith.constant 0 : index
    %0 = vector.load %arg1[%c0, %c0_0] : memref<2x128xf32, #tpu.memory_space<vmem>>, vector<2x128xf32>
    %c0_1 = arith.constant 0 : index
    %c0_2 = arith.constant 0 : index
    %1 = vector.load %arg2[%c0_1, %c0_2] : memref<64x2xf32, #tpu.memory_space<vmem>>, vector<64x2xf32>
    %2 = vector.extract_strided_slice %1 {offsets = [0, 0], sizes = [64, 1], strides = [1, 1]} : vector<64x2xf32> to vector<64x1xf32>
    %3 = vector.extract_strided_slice %0 {offsets = [0, 0], sizes = [1, 128], strides = [1, 1]} : vector<2x128xf32> to vector<1x128xf32>
    %4 = vector.broadcast %2 : vector<64x1xf32> to vector<64x128xf32>
    %5 = vector.broadcast %3 : vector<1x128xf32> to vector<64x128xf32>
    %6 = arith.mulf %4, %5 : vector<64x128xf32>
    %7 = vector.extract_strided_slice %1 {offsets = [0, 1], sizes = [64, 1], strides = [1, 1]} : vector<64x2xf32> to vector<64x1xf32>
    %8 = vector.extract_strided_slice %0 {offsets = [1, 0], sizes = [1, 128], strides = [1, 1]} : vector<2x128xf32> to vector<1x128xf32>
    %9 = vector.broadcast %7 : vector<64x1xf32> to vector<64x128xf32>
    %10 = vector.broadcast %8 : vector<1x128xf32> to vector<64x128xf32>
    %11 = arith.mulf %9, %10 : vector<64x128xf32>
    %12 = arith.addf %6, %11 : vector<64x128xf32>
    %c0_3 = arith.constant 0 : index
    %c0_4 = arith.constant 0 : index
    %13 = vector.load %arg3[%c0_3, %c0_4] : memref<64x1xf32, #tpu.memory_space<vmem>>, vector<64x1xf32>
    %14 = vector.broadcast %13 : vector<64x1xf32> to vector<64x128xf32>
    %15 = arith.addf %12, %14 : vector<64x128xf32>
    %cst = arith.constant 0.000000e+00 : f32
    %16 = vector.broadcast %cst : f32 to vector<64x128xf32>
    %17 = arith.maximumf %15, %16 : vector<64x128xf32>
    %c0_5 = arith.constant 0 : index
    %c0_6 = arith.constant 0 : index
    %18 = vector.load %arg4[%c0_5, %c0_6] : memref<64x64xf32, #tpu.memory_space<vmem>>, vector<64x64xf32>
    %cst_7 = arith.constant dense<0.000000e+00> : vector<64x128xf32>
    %19 = tpu.matmul %18, %17, %cst_7 {dimension_numbers = #tpu.dot_dimension_numbers<[1], [0], [0], [1], [0, 0, 1, 1], [], []>, precision = #tpu.contract_precision<fp32>} : vector<64x64xf32>, vector<64x128xf32>, vector<64x128xf32> -> vector<64x128xf32>
    %cst_8 = arith.constant 0.000000e+00 : f32
    %20 = vector.broadcast %cst_8 : f32 to vector<64x128xf32>
    %21 = arith.maximumf %19, %20 : vector<64x128xf32>
    %c0_9 = arith.constant 0 : index
    %c0_10 = arith.constant 0 : index
    %22 = vector.load %arg5[%c0_9, %c0_10] : memref<64x2xf32, #tpu.memory_space<vmem>>, vector<64x2xf32>
    %23 = vector.extract_strided_slice %22 {offsets = [0, 0], sizes = [64, 1], strides = [1, 1]} : vector<64x2xf32> to vector<64x1xf32>
    %24 = vector.broadcast %23 : vector<64x1xf32> to vector<64x128xf32>
    %25 = arith.mulf %21, %24 : vector<64x128xf32>
    %cst_11 = arith.constant dense<0.000000e+00> : vector<128xf32>
    %26 = vector.multi_reduction <add>, %25, %cst_11 [0] : vector<64x128xf32> to vector<128xf32>
    %27 = vector.shape_cast %26 : vector<128xf32> to vector<1x128xf32>
    %28 = vector.extract_strided_slice %22 {offsets = [0, 1], sizes = [64, 1], strides = [1, 1]} : vector<64x2xf32> to vector<64x1xf32>
    %29 = vector.broadcast %28 : vector<64x1xf32> to vector<64x128xf32>
    %30 = arith.mulf %21, %29 : vector<64x128xf32>
    %cst_12 = arith.constant dense<0.000000e+00> : vector<128xf32>
    %31 = vector.multi_reduction <add>, %30, %cst_12 [0] : vector<64x128xf32> to vector<128xf32>
    %32 = vector.shape_cast %31 : vector<128xf32> to vector<1x128xf32>
    %33 = tpu.concatenate %27, %32 in 0 : vector<1x128xf32>, vector<1x128xf32> -> vector<2x128xf32>
    %c0_13 = arith.constant 0 : index
    %c0_14 = arith.constant 0 : index
    %34 = vector.load %arg6[%c0_13, %c0_14] : memref<2x128xf32, #tpu.memory_space<vmem>>, vector<2x128xf32>
    tpu.vector_store %arg6[%c0_13, %c0_14], %33 {strides = array<i32>} : memref<2x128xf32, #tpu.memory_space<vmem>>, vector<2x128xf32>,
    return
  }
  func.func @transform_0(%arg0: i32) -> (i32, i32) {
    %c0_i32 = arith.constant 0 : i32
    %c0_i32_0 = arith.constant 0 : i32
    return %c0_i32, %arg0 : i32, i32
  }
  func.func @transform_1(%arg0: i32) -> (i32, i32) {
    %c0_i32 = arith.constant 0 : i32
    %c0_i32_0 = arith.constant 0 : i32
    %c0_i32_1 = arith.constant 0 : i32
    return %c0_i32, %c0_i32_0 : i32, i32
  }
  func.func @transform_2(%arg0: i32) -> (i32, i32) {
    %c0_i32 = arith.constant 0 : i32
    %c0_i32_0 = arith.constant 0 : i32
    %c0_i32_1 = arith.constant 0 : i32
    return %c0_i32, %c0_i32_0 : i32, i32
  }
  func.func @transform_3(%arg0: i32) -> (i32, i32) {
    %c0_i32 = arith.constant 0 : i32
    %c0_i32_0 = arith.constant 0 : i32
    %c0_i32_1 = arith.constant 0 : i32
    return %c0_i32, %c0_i32_0 : i32, i32
  }
  func.func @transform_4(%arg0: i32) -> (i32, i32) {
    %c0_i32 = arith.constant 0 : i32
    %c0_i32_0 = arith.constant 0 : i32
    %c0_i32_1 = arith.constant 0 : i32
    return %c0_i32, %c0_i32_0 : i32, i32
  }
  func.func @transform_5(%arg0: i32) -> (i32, i32) {
    %c0_i32 = arith.constant 0 : i32
    %c0_i32_0 = arith.constant 0 : i32
    return %c0_i32, %arg0 : i32, i32
  }
}

</mosaic_0001>

<llo_original>
// kernel: _forward_impl.1
$region0: #{_forward_impl.1}
  #allocation0 [shape = 'u32[]', space=smem, size = 0x4, offset = 0x4, fixed_abs, tag = 'smem constant byte address 0x4 - core index']
  #allocation1 [shape = 'u32[144,128]{1,0:T(1,128)}', space=vmem, size = 0x12000, scoped, tag = 'internal scratch']
  %s0 = inlined_call_operand.vmem [shape: f32[2,128], index: 0, kind: input, shape index: {}]
  %s1 = inlined_call_operand.vmem [shape: f32[64,2], index: 1, kind: input, shape index: {}]
  %s2 = inlined_call_operand.vmem [shape: f32[64,1], index: 2, kind: input, shape index: {}]
  %s3 = inlined_call_operand.vmem [shape: f32[64,64], index: 3, kind: input, shape index: {}]
  %s4 = inlined_call_operand.vmem [shape: f32[64,2], index: 4, kind: input, shape index: {}]
  %s5 = inlined_call_operand.vmem [shape: f32[2,128], index: 5, kind: output, shape index: {}]
  %s6 = sld [smem:[#allocation0]]
  $region30: #{_forward_impl.1} parent=0
    _
  %s8 = ssub.s32 1, %s6
  %s9 = scalar_select 0, %s8, %s6
  // Predicated region
  $region2: #{_forward_impl.1} parent=0 // pred_check
    _
  $region3: #{_forward_impl.1} parent=0 // pred_check_branch
    %11 = sbr.rel (0) target = $region5
  $region4: #{_forward_impl.1} parent=0 // pred_region
    _
  $region5: #{_forward_impl.1} parent=0 // pred_fallthru
    _
  // Predicated region
  $region6: #{_forward_impl.1} parent=0 // pred_check
    _
  $region7: #{_forward_impl.1} parent=0 // pred_check_branch
    %13 = sbr.rel (0) target = $region9
  $region8: #{_forward_impl.1} parent=0 // pred_region
    _
  $region9: #{_forward_impl.1} parent=0 // pred_fallthru
    _
  // Predicated region
  $region10: #{_forward_impl.1} parent=0 // pred_check
    _
  $region11: #{_forward_impl.1} parent=0 // pred_check_branch
    %15 = sbr.rel (0) target = $region13
  $region12: #{_forward_impl.1} parent=0 // pred_region
    _
  $region13: #{_forward_impl.1} parent=0 // pred_fallthru
    _
  // Predicated region
  $region14: #{_forward_impl.1} parent=0 // pred_check
    _
  $region15: #{_forward_impl.1} parent=0 // pred_check_branch
    %17 = sbr.rel (0) target = $region17
  $region16: #{_forward_impl.1} parent=0 // pred_region
    _
  $region17: #{_forward_impl.1} parent=0 // pred_fallthru
    _
  // Predicated region
  $region18: #{_forward_impl.1} parent=0 // pred_check
    _
  $region19: #{_forward_impl.1} parent=0 // pred_check_branch
    %19 = sbr.rel (0) target = $region21
  $region20: #{_forward_impl.1} parent=0 // pred_region
    _
  $region21: #{_forward_impl.1} parent=0 // pred_fallthru
    _
  %v20 = vld [vmem:[%s0] sm:$0x3]
  %v21 = vld [vmem:[%s1] sm:$0xff]
  %v22 = vld [vmem:[%s1 + $0x8] sm:$0xff]
  %v23 = vld [vmem:[%s1 + $0x10] sm:$0xff]
  %v24 = vld [vmem:[%s1 + $0x18] sm:$0xff]
  %v25 = vld [vmem:[%s1 + $0x20] sm:$0xff]
  %v26 = vld [vmem:[%s1 + $0x28] sm:$0xff]
  %v27 = vld [vmem:[%s1 + $0x30] sm:$0xff]
  %v28 = vld [vmem:[%s1 + $0x38] sm:$0xff]
  %30 = vset.pattern.permute.xlu0 0
  %31 = vperm.xlu0 %30, %v21
  %v32 = vpop.permute.xlu0 %31
  %35 = vset.pattern.permute.xlu0 0
  %36 = vperm.xlu0 %35, %v22
  %v37 = vpop.permute.xlu0 %36
  %40 = vset.pattern.permute.xlu0 0
  %41 = vperm.xlu0 %40, %v23
  %v42 = vpop.permute.xlu0 %41
  %45 = vset.pattern.permute.xlu0 0
  %46 = vperm.xlu0 %45, %v24
  %v47 = vpop.permute.xlu0 %46
  %50 = vset.pattern.permute.xlu0 0
  %51 = vperm.xlu0 %50, %v25
  %v52 = vpop.permute.xlu0 %51
  %55 = vset.pattern.permute.xlu0 0
  %56 = vperm.xlu0 %55, %v26
  %v57 = vpop.permute.xlu0 %56
  %60 = vset.pattern.permute.xlu0 0
  %61 = vperm.xlu0 %60, %v27
  %v62 = vpop.permute.xlu0 %61
  %65 = vset.pattern.permute.xlu0 0
  %66 = vperm.xlu0 %65, %v28
  %v67 = vpop.permute.xlu0 %66
  %v69 = vlaneseq
  %v70 = vshrl.u32 %v69, 7
  %v71 = vsub.s32 0, %v70
  %v72 = vrot.slane %v20, %v71
  %v73 = vmul.f32 %v32, %v72
  %v74 = vmul.f32 %v37, %v72
  %v75 = vmul.f32 %v42, %v72
  %v76 = vmul.f32 %v47, %v72
  %v77 = vmul.f32 %v52, %v72
  %v78 = vmul.f32 %v57, %v72
  %v79 = vmul.f32 %v62, %v72
  %v80 = vmul.f32 %v67, %v72
  %81 = vset.pattern.permute.xlu0 1
  %82 = vperm.xlu0 %81, %v21
  %v83 = vpop.permute.xlu0 %82
  %85 = vset.pattern.permute.xlu0 1
  %86 = vperm.xlu0 %85, %v22
  %v87 = vpop.permute.xlu0 %86
  %89 = vset.pattern.permute.xlu0 1
  %90 = vperm.xlu0 %89, %v23
  %v91 = vpop.permute.xlu0 %90
  %93 = vset.pattern.permute.xlu0 1
  %94 = vperm.xlu0 %93, %v24
  %v95 = vpop.permute.xlu0 %94
  %97 = vset.pattern.permute.xlu0 1
  %98 = vperm.xlu0 %97, %v25
  %v99 = vpop.permute.xlu0 %98
  %101 = vset.pattern.permute.xlu0 1
  %102 = vperm.xlu0 %101, %v26
  %v103 = vpop.permute.xlu0 %102
  %105 = vset.pattern.permute.xlu0 1
  %106 = vperm.xlu0 %105, %v27
  %v107 = vpop.permute.xlu0 %106
  %109 = vset.pattern.permute.xlu0 1
  %110 = vperm.xlu0 %109, %v28
  %v111 = vpop.permute.xlu0 %110
  %v113 = vlaneseq
  %v114 = vshrl.u32 %v113, 7
  %v115 = vsub.s32 1, %v114
  %v116 = vrot.slane %v20, %v115
  %v117 = vmul.f32 %v83, %v116
  %v118 = vmul.f32 %v87, %v116
  %v119 = vmul.f32 %v91, %v116
  %v120 = vmul.f32 %v95, %v116
  %v121 = vmul.f32 %v99, %v116
  %v122 = vmul.f32 %v103, %v116
  %v123 = vmul.f32 %v107, %v116
  %v124 = vmul.f32 %v111, %v116
  %v125 = vadd.f32 %v73, %v117
  %v126 = vadd.f32 %v74, %v118
  %v127 = vadd.f32 %v75, %v119
  %v128 = vadd.f32 %v76, %v120
  %v129 = vadd.f32 %v77, %v121
  %v130 = vadd.f32 %v78, %v122
  %v131 = vadd.f32 %v79, %v123
  %v132 = vadd.f32 %v80, %v124
  %v133 = vld [vmem:[%s2] sm:$0xff]
  %v134 = vld [vmem:[%s2 + $0x8] sm:$0xff]
  %v135 = vld [vmem:[%s2 + $0x10] sm:$0xff]
  %v136 = vld [vmem:[%s2 + $0x18] sm:$0xff]
  %v137 = vld [vmem:[%s2 + $0x20] sm:$0xff]
  %v138 = vld [vmem:[%s2 + $0x28] sm:$0xff]
  %v139 = vld [vmem:[%s2 + $0x30] sm:$0xff]
  %v140 = vld [vmem:[%s2 + $0x38] sm:$0xff]
  %142 = vset.pattern.permute.xlu0 0
  %143 = vperm.xlu0 %142, %v133
  %v144 = vpop.permute.xlu0 %143
  %147 = vset.pattern.permute.xlu0 0
  %148 = vperm.xlu0 %147, %v134
  %v149 = vpop.permute.xlu0 %148
  %152 = vset.pattern.permute.xlu0 0
  %153 = vperm.xlu0 %152, %v135
  %v154 = vpop.permute.xlu0 %153
  %157 = vset.pattern.permute.xlu0 0
  %158 = vperm.xlu0 %157, %v136
  %v159 = vpop.permute.xlu0 %158
  %162 = vset.pattern.permute.xlu0 0
  %163 = vperm.xlu0 %162, %v137
  %v164 = vpop.permute.xlu0 %163
  %167 = vset.pattern.permute.xlu0 0
  %168 = vperm.xlu0 %167, %v138
  %v169 = vpop.permute.xlu0 %168
  %172 = vset.pattern.permute.xlu0 0
  %173 = vperm.xlu0 %172, %v139
  %v174 = vpop.permute.xlu0 %173
  %177 = vset.pattern.permute.xlu0 0
  %178 = vperm.xlu0 %177, %v140
  %v179 = vpop.permute.xlu0 %178
  %v181 = vadd.f32 %v125, %v144
  %v182 = vadd.f32 %v126, %v149
  %v183 = vadd.f32 %v127, %v154
  %v184 = vadd.f32 %v128, %v159
  %v185 = vadd.f32 %v129, %v164
  %v186 = vadd.f32 %v130, %v169
  %v187 = vadd.f32 %v131, %v174
  %v188 = vadd.f32 %v132, %v179
  %v189 = vmax.f32 %v181, 0.0
  %v190 = vmax.f32 %v182, 0.0
  %v191 = vmax.f32 %v183, 0.0
  %v192 = vmax.f32 %v184, 0.0
  %v193 = vmax.f32 %v185, 0.0
  %v194 = vmax.f32 %v186, 0.0
  %v195 = vmax.f32 %v187, 0.0
  %v196 = vmax.f32 %v188, 0.0
  %v197 = vld [vmem:[%s3] sm:$0xff]
  %v198 = vld [vmem:[%s3 + $0x8] sm:$0xff]
  %v199 = vld [vmem:[%s3 + $0x10] sm:$0xff]
  %v200 = vld [vmem:[%s3 + $0x18] sm:$0xff]
  %v201 = vld [vmem:[%s3 + $0x20] sm:$0xff]
  %v202 = vld [vmem:[%s3 + $0x28] sm:$0xff]
  %v203 = vld [vmem:[%s3 + $0x30] sm:$0xff]
  %v204 = vld [vmem:[%s3 + $0x38] sm:$0xff]
  %vm205 = vcmask 523264
  %v207 = vsel %vm205, %v197, 0
  %v210 = vsel %vm205, %v198, 0
  %v213 = vsel %vm205, %v199, 0
  %v216 = vsel %vm205, %v200, 0
  %v219 = vsel %vm205, %v201, 0
  %v222 = vsel %vm205, %v202, 0
  %v225 = vsel %vm205, %v203, 0
  %v228 = vsel %vm205, %v204, 0
  %230 = vmatprep.subr.mxu0 0.0
  %v231 = vand.u32 %v189, 4294901760
  %232 = vmatpush1.msra.mxu0 %v231
  %233 = vmatprep.subr.mxu0 0.0
  %v234 = vand.u32 %v190, 4294901760
  %235 = vmatpush1.msra.mxu0 %v234
  %236 = vmatprep.subr.mxu0 0.0
  %v237 = vand.u32 %v191, 4294901760
  %238 = vmatpush1.msra.mxu0 %v237
  %239 = vmatprep.subr.mxu0 0.0
  %v240 = vand.u32 %v192, 4294901760
  %241 = vmatpush1.msra.mxu0 %v240
  %242 = vmatprep.subr.mxu0 0.0
  %v243 = vand.u32 %v193, 4294901760
  %244 = vmatpush1.msra.mxu0 %v243
  %245 = vmatprep.subr.mxu0 0.0
  %v246 = vand.u32 %v194, 4294901760
  %247 = vmatpush1.msra.mxu0 %v246
  %248 = vmatprep.subr.mxu0 0.0
  %v249 = vand.u32 %v195, 4294901760
  %250 = vmatpush1.msra.mxu0 %v249
  %251 = vmatprep.subr.mxu0 0.0
  %v252 = vand.u32 %v196, 4294901760
  %253 = vmatpush1.msra.mxu0 %v252
  %254 = vmatprep.subr.mxu0 0.0
  %255 = vmatpush1.msra.mxu0 0.0
  %256 = vmatprep.subr.mxu0 0.0
  %257 = vmatpush1.msra.mxu0 0.0
  %258 = vmatprep.subr.mxu0 0.0
  %259 = vmatpush1.msra.mxu0 0.0
  %260 = vmatprep.subr.mxu0 0.0
  %261 = vmatpush1.msra.mxu0 0.0
  %262 = vmatprep.subr.mxu0 0.0
  %263 = vmatpush1.msra.mxu0 0.0
  %264 = vmatprep.subr.mxu0 0.0
  %265 = vmatpush1.msra.mxu0 0.0
  %266 = vmatprep.subr.mxu0 0.0
  %267 = vmatpush1.msra.mxu0 0.0
  %268 = vmatprep.subr.mxu0 0.0
  %269 = vmatpush1.msra.mxu0 0.0
  %270 = vmatprep.subr.mxu0 0.0
  %271 = vmatpush1.msra.mxu0 0.0
  %272 = vmatprep.subr.mxu0 0.0
  %273 = vmatpush1.msra.mxu0 0.0
  %274 = vmatprep.subr.mxu0 0.0
  %275 = vmatpush1.msra.mxu0 0.0
  %276 = vmatprep.subr.mxu0 0.0
  %277 = vmatpush1.msra.mxu0 0.0
  %278 = vmatprep.subr.mxu0 0.0
  %279 = vmatpush1.msra.mxu0 0.0
  %280 = vmatprep.subr.mxu0 0.0
  %281 = vmatpush1.msra.mxu0 0.0
  %282 = vmatprep.subr.mxu0 0.0
  %283 = vmatpush1.msra.mxu0 0.0
  %284 = vmatprep.subr.mxu0 0.0
  %285 = vmatpush1.msra.mxu0 0.0
  %286 = vmatprep.subr.mxu0 0.0
  %287 = vmatpush1.msra.mxu0 0.0
  %288 = vmatprep.subr.mxu0 0.0
  %289 = vmatpush1.msra.mxu0 0.0
  %290 = vmatprep.subr.mxu0 0.0
  %291 = vmatpush1.msra.mxu0 0.0
  %292 = vmatprep.subr.mxu0 0.0
  %293 = vmatpush1.msra.mxu0 0.0
  %294 = vmatprep.subr.mxu0 0.0
  %295 = vmatpush1.msra.mxu0 0.0
  %296 = vmatprep.subr.mxu0 0.0
  %297 = vmatpush1.msra.mxu0 0.0
  %298 = vmatprep.subr.mxu0 0.0
  %299 = vmatpush1.msra.mxu0 0.0
  %300 = vmatprep.subr.mxu0 0.0
  %301 = vmatpush1.msra.mxu0 0.0
  %302 = vmatprep.mubr.f32.mxu0 0.0
  %v303 = vand.u32 %v207, 4294901760
  %v304 = vsub.f32 %v207, %v303
  %v305 = vand.u32 %v304, 4294901760
  %v306 = vsub.f32 %v304, %v305
  %v307 = vand.u32 %v306, 4294901760
  %308 = vmatmul.mubr.f32.gmra.mrb[0].mxu0 %v307
  %v309 = vpop.f32.mrb[0].mxu0
  %v310 = vadd.f32 0.0, %v309
  %v311 = vpop.f32.mrb[0].mxu0
  %312 = vmatprep.mubr.f32.mxu0 0.0
  %v313 = vand.u32 %v210, 4294901760
  %v314 = vsub.f32 %v210, %v313
  %v315 = vand.u32 %v314, 4294901760
  %v316 = vsub.f32 %v314, %v315
  %v317 = vand.u32 %v316, 4294901760
  %318 = vmatmul.mubr.f32.gmra.mrb[0].mxu0 %v317
  %v319 = vpop.f32.mrb[0].mxu0
  %v320 = vadd.f32 0.0, %v319
  %v321 = vpop.f32.mrb[0].mxu0
  %322 = vmatprep.mubr.f32.mxu0 0.0
  %v323 = vand.u32 %v213, 4294901760
  %v324 = vsub.f32 %v213, %v323
  %v325 = vand.u32 %v324, 4294901760
  %v326 = vsub.f32 %v324, %v325
  %v327 = vand.u32 %v326, 4294901760
  %328 = vmatmul.mubr.f32.gmra.mrb[0].mxu0 %v327
  %v329 = vpop.f32.mrb[0].mxu0
  %v330 = vadd.f32 0.0, %v329
  %v331 = vpop.f32.mrb[0].mxu0
  %332 = vmatprep.mubr.f32.mxu0 0.0
  %v333 = vand.u32 %v216, 4294901760
  %v334 = vsub.f32 %v216, %v333
  %v335 = vand.u32 %v334, 4294901760
  %v336 = vsub.f32 %v334, %v335
  %v337 = vand.u32 %v336, 4294901760
  %338 = vmatmul.mubr.f32.gmra.mrb[0].mxu0 %v337
  %v339 = vpop.f32.mrb[0].mxu0
  %v340 = vadd.f32 0.0, %v339
  %v341 = vpop.f32.mrb[0].mxu0
  %342 = vmatprep.mubr.f32.mxu0 0.0
  %v343 = vand.u32 %v219, 4294901760
  %v344 = vsub.f32 %v219, %v343
  %v345 = vand.u32 %v344, 4294901760
  %v346 = vsub.f32 %v344, %v345
  %v347 = vand.u32 %v346, 4294901760
  %348 = vmatmul.mubr.f32.gmra.mrb[0].mxu0 %v347
  %v349 = vpop.f32.mrb[0].mxu0
  %v350 = vadd.f32 0.0, %v349
  %v351 = vpop.f32.mrb[0].mxu0
  %352 = vmatprep.mubr.f32.mxu0 0.0
  %v353 = vand.u32 %v222, 4294901760
  %v354 = vsub.f32 %v222, %v353
  %v355 = vand.u32 %v354, 4294901760
  %v356 = vsub.f32 %v354, %v355
  %v357 = vand.u32 %v356, 4294901760
  %358 = vmatmul.mubr.f32.gmra.mrb[0].mxu0 %v357
  %v359 = vpop.f32.mrb[0].mxu0
  %v360 = vadd.f32 0.0, %v359
  %v361 = vpop.f32.mrb[0].mxu0
  %362 = vmatprep.mubr.f32.mxu0 0.0
  %v363 = vand.u32 %v225, 4294901760
  %v364 = vsub.f32 %v225, %v363
  %v365 = vand.u32 %v364, 4294901760
  %v366 = vsub.f32 %v364, %v365
  %v367 = vand.u32 %v366, 4294901760
  %368 = vmatmul.mubr.f32.gmra.mrb[0].mxu0 %v367
  %v369 = vpop.f32.mrb[0].mxu0
  %v370 = vadd.f32 0.0, %v369
  %v371 = vpop.f32.mrb[0].mxu0
  %372 = vmatprep.mubr.f32.mxu0 0.0
  %v373 = vand.u32 %v228, 4294901760
  %v374 = vsub.f32 %v228, %v373
  %v375 = vand.u32 %v374, 4294901760
  %v376 = vsub.f32 %v374, %v375
  %v377 = vand.u32 %v376, 4294901760
  %378 = vmatmul.mubr.f32.gmra.mrb[0].mxu0 %v377
  %v379 = vpop.f32.mrb[0].mxu0
  %v380 = vadd.f32 0.0, %v379
  %v381 = vpop.f32.mrb[0].mxu0
  %382 = vdwg.mxu0
  %383 = vmatprep.subr.mxu0 0.0
  %v384 = vand.u32 %v189, 4294901760
  %v385 = vsub.f32 %v189, %v384
  %v386 = vand.u32 %v385, 4294901760
  %v387 = vsub.f32 %v385, %v386
  %v388 = vand.u32 %v387, 4294901760
  %389 = vmatpush1.msra.mxu0 %v388
  %390 = vmatprep.subr.mxu0 0.0
  %v391 = vand.u32 %v190, 4294901760
  %v392 = vsub.f32 %v190, %v391
  %v393 = vand.u32 %v392, 4294901760
  %v394 = vsub.f32 %v392, %v393
  %v395 = vand.u32 %v394, 4294901760
  %396 = vmatpush1.msra.mxu0 %v395
  %397 = vmatprep.subr.mxu0 0.0
  %v398 = vand.u32 %v191, 4294901760
  %v399 = vsub.f32 %v191, %v398
  %v400 = vand.u32 %v399, 4294901760
  %v401 = vsub.f32 %v399, %v400
  %v402 = vand.u32 %v401, 4294901760
  %403 = vmatpush1.msra.mxu0 %v402
  %404 = vmatprep.subr.mxu0 0.0
  %v405 = vand.u32 %v192, 4294901760
  %v406 = vsub.f32 %v192, %v405
  %v407 = vand.u32 %v406, 4294901760
  %v408 = vsub.f32 %v406, %v407
  %v409 = vand.u32 %v408, 4294901760
  %410 = vmatpush1.msra.mxu0 %v409
  %411 = vmatprep.subr.mxu0 0.0
  %v412 = vand.u32 %v193, 4294901760
  %v413 = vsub.f32 %v193, %v412
  %v414 = vand.u32 %v413, 4294901760
  %v415 = vsub.f32 %v413, %v414
  %v416 = vand.u32 %v415, 4294901760
  %417 = vmatpush1.msra.mxu0 %v416
  %418 = vmatprep.subr.mxu0 0.0
  %v419 = vand.u32 %v194, 4294901760
  %v420 = vsub.f32 %v194, %v419
  %v421 = vand.u32 %v420, 4294901760
  %v422 = vsub.f32 %v420, %v421
  %v423 = vand.u32 %v422, 4294901760
  %424 = vmatpush1.msra.mxu0 %v423
  %425 = vmatprep.subr.mxu0 0.0
  %v426 = vand.u32 %v195, 4294901760
  %v427 = vsub.f32 %v195, %v426
  %v428 = vand.u32 %v427, 4294901760
  %v429 = vsub.f32 %v427, %v428
  %v430 = vand.u32 %v429, 4294901760
  %431 = vmatpush1.msra.mxu0 %v430
  %432 = vmatprep.subr.mxu0 0.0
  %v433 = vand.u32 %v196, 4294901760
  %v434 = vsub.f32 %v196, %v433
  %v435 = vand.u32 %v434, 4294901760
  %v436 = vsub.f32 %v434, %v435
  %v437 = vand.u32 %v436, 4294901760
  %438 = vmatpush1.msra.mxu0 %v437
  %439 = vmatprep.subr.mxu0 0.0
  %440 = vmatpush1.msra.mxu0 0.0
  %441 = vmatprep.subr.mxu0 0.0
  %442 = vmatpush1.msra.mxu0 0.0
  %443 = vmatprep.subr.mxu0 0.0
  %444 = vmatpush1.msra.mxu0 0.0
  %445 = vmatprep.subr.mxu0 0.0
  %446 = vmatpush1.msra.mxu0 0.0
  %447 = vmatprep.subr.mxu0 0.0
  %448 = vmatpush1.msra.mxu0 0.0
  %449 = vmatprep.subr.mxu0 0.0
  %450 = vmatpush1.msra.mxu0 0.0
  %451 = vmatprep.subr.mxu0 0.0
  %452 = vmatpush1.msra.mxu0 0.0
  %453 = vmatprep.subr.mxu0 0.0
  %454 = vmatpush1.msra.mxu0 0.0
  %455 = vmatprep.subr.mxu0 0.0
  %456 = vmatpush1.msra.mxu0 0.0
  %457 = vmatprep.subr.mxu0 0.0
  %458 = vmatpush1.msra.mxu0 0.0
  %459 = vmatprep.subr.mxu0 0.0
  %460 = vmatpush1.msra.mxu0 0.0
  %461 = vmatprep.subr.mxu0 0.0
  %462 = vmatpush1.msra.mxu0 0.0
  %463 = vmatprep.subr.mxu0 0.0
  %464 = vmatpush1.msra.mxu0 0.0
  %465 = vmatprep.subr.mxu0 0.0
  %466 = vmatpush1.msra.mxu0 0.0
  %467 = vmatprep.subr.mxu0 0.0
  %468 = vmatpush1.msra.mxu0 0.0
  %469 = vmatprep.subr.mxu0 0.0
  %470 = vmatpush1.msra.mxu0 0.0
  %471 = vmatprep.subr.mxu0 0.0
  %472 = vmatpush1.msra.mxu0 0.0
  %473 = vmatprep.subr.mxu0 0.0
  %474 = vmatpush1.msra.mxu0 0.0
  %475 = vmatprep.subr.mxu0 0.0
  %476 = vmatpush1.msra.mxu0 0.0
  %477 = vmatprep.subr.mxu0 0.0
  %478 = vmatpush1.msra.mxu0 0.0
  %479 = vmatprep.subr.mxu0 0.0
  %480 = vmatpush1.msra.mxu0 0.0
  %481 = vmatprep.subr.mxu0 0.0
  %482 = vmatpush1.msra.mxu0 0.0
  %483 = vmatprep.subr.mxu0 0.0
  %484 = vmatpush1.msra.mxu0 0.0
  %485 = vmatprep.subr.mxu0 0.0
  %486 = vmatpush1.msra.mxu0 0.0
  %487 = vmatprep.mubr.f32.mxu0 0.0
  %v488 = vand.u32 %v207, 4294901760
  %489 = vmatmul.mubr.f32.gmra.mrb[0].mxu0 %v488
  %v490 = vpop.f32.mrb[0].mxu0
  %v491 = vadd.f32 %v310, %v490
  %v492 = vpop.f32.mrb[0].mxu0
  %493 = vmatprep.mubr.f32.mxu0 0.0
  %v494 = vand.u32 %v210, 4294901760
  %495 = vmatmul.mubr.f32.gmra.mrb[0].mxu0 %v494
  %v496 = vpop.f32.mrb[0].mxu0
  %v497 = vadd.f32 %v320, %v496
  %v498 = vpop.f32.mrb[0].mxu0
  %499 = vmatprep.mubr.f32.mxu0 0.0
  %v500 = vand.u32 %v213, 4294901760
  %501 = vmatmul.mubr.f32.gmra.mrb[0].mxu0 %v500
  %v502 = vpop.f32.mrb[0].mxu0
  %v503 = vadd.f32 %v330, %v502
  %v504 = vpop.f32.mrb[0].mxu0
  %505 = vmatprep.mubr.f32.mxu0 0.0
  %v506 = vand.u32 %v216, 4294901760
  %507 = vmatmul.mubr.f32.gmra.mrb[0].mxu0 %v506
  %v508 = vpop.f32.mrb[0].mxu0
  %v509 = vadd.f32 %v340, %v508
  %v510 = vpop.f32.mrb[0].mxu0
  %511 = vmatprep.mubr.f32.mxu0 0.0
  %v512 = vand.u32 %v219, 4294901760
  %513 = vmatmul.mubr.f32.gmra.mrb[0].mxu0 %v512
  %v514 = vpop.f32.mrb[0].mxu0
  %v515 = vadd.f32 %v350, %v514
  %v516 = vpop.f32.mrb[0].mxu0
  %517 = vmatprep.mubr.f32.mxu0 0.0
  %v518 = vand.u32 %v222, 4294901760
  %519 = vmatmul.mubr.f32.gmra.mrb[0].mxu0 %v518
  %v520 = vpop.f32.mrb[0].mxu0
  %v521 = vadd.f32 %v360, %v520
  %v522 = vpop.f32.mrb[0].mxu0
  %523 = vmatprep.mubr.f32.mxu0 0.0
  %v524 = vand.u32 %v225, 4294901760
  %525 = vmatmul.mubr.f32.gmra.mrb[0].mxu0 %v524
  %v526 = vpop.f32.mrb[0].mxu0
  %v527 = vadd.f32 %v370, %v526
  %v528 = vpop.f32.mrb[0].mxu0
  %529 = vmatprep.mubr.f32.mxu0 0.0
  %v530 = vand.u32 %v228, 4294901760
  %531 = vmatmul.mubr.f32.gmra.mrb[0].mxu0 %v530
  %v532 = vpop.f32.mrb[0].mxu0
  %v533 = vadd.f32 %v380, %v532
  %v534 = vpop.f32.mrb[0].mxu0
  %535 = vdwg.mxu0
  %536 = vmatprep.subr.mxu0 0.0
  %v537 = vand.u32 %v189, 4294901760
  %v538 = vsub.f32 %v189, %v537
  %539 = vmatpush1.msra.mxu0 %v538
  %540 = vmatprep.subr.mxu0 0.0
  %v541 = vand.u32 %v190, 4294901760
  %v542 = vsub.f32 %v190, %v541
  %543 = vmatpush1.msra.mxu0 %v542
  %544 = vmatprep.subr.mxu0 0.0
  %v545 = vand.u32 %v191, 4294901760
  %v546 = vsub.f32 %v191, %v545
  %547 = vmatpush1.msra.mxu0 %v546
  %548 = vmatprep.subr.mxu0 0.0
  %v549 = vand.u32 %v192, 4294901760
  %v550 = vsub.f32 %v192, %v549
  %551 = vmatpush1.msra.mxu0 %v550
  %552 = vmatprep.subr.mxu0 0.0
  %v553 = vand.u32 %v193, 4294901760
  %v554 = vsub.f32 %v193, %v553
  %555 = vmatpush1.msra.mxu0 %v554
  %556 = vmatprep.subr.mxu0 0.0
  %v557 = vand.u32 %v194, 4294901760
  %v558 = vsub.f32 %v194, %v557
  %559 = vmatpush1.msra.mxu0 %v558
  %560 = vmatprep.subr.mxu0 0.0
  %v561 = vand.u32 %v195, 4294901760
  %v562 = vsub.f32 %v195, %v561
  %563 = vmatpush1.msra.mxu0 %v562
  %564 = vmatprep.subr.mxu0 0.0
  %v565 = vand.u32 %v196, 4294901760
  %v566 = vsub.f32 %v196, %v565
  %567 = vmatpush1.msra.mxu0 %v566
  %568 = vmatprep.subr.mxu0 0.0
  %569 = vmatpush1.msra.mxu0 0.0
  %570 = vmatprep.subr.mxu0 0.0
  %571 = vmatpush1.msra.mxu0 0.0
  %572 = vmatprep.subr.mxu0 0.0
  %573 = vmatpush1.msra.mxu0 0.0
  %574 = vmatprep.subr.mxu0 0.0
  %575 = vmatpush1.msra.mxu0 0.0
  %576 = vmatprep.subr.mxu0 0.0
  %577 = vmatpush1.msra.mxu0 0.0
  %578 = vmatprep.subr.mxu0 0.0
  %579 = vmatpush1.msra.mxu0 0.0
  %580 = vmatprep.subr.mxu0 0.0
  %581 = vmatpush1.msra.mxu0 0.0
  %582 = vmatprep.subr.mxu0 0.0
  %583 = vmatpush1.msra.mxu0 0.0
  %584 = vmatprep.subr.mxu0 0.0
  %585 = vmatpush1.msra.mxu0 0.0
  %586 = vmatprep.subr.mxu0 0.0
  %587 = vmatpush1.msra.mxu0 0.0
  %588 = vmatprep.subr.mxu0 0.0
  %589 = vmatpush1.msra.mxu0 0.0
  %590 = vmatprep.subr.mxu0 0.0
  %591 = vmatpush1.msra.mxu0 0.0
  %592 = vmatprep.subr.mxu0 0.0
  %593 = vmatpush1.msra.mxu0 0.0
  %594 = vmatprep.subr.mxu0 0.0
  %595 = vmatpush1.msra.mxu0 0.0
  %596 = vmatprep.subr.mxu0 0.0
  %597 = vmatpush1.msra.mxu0 0.0
  %598 = vmatprep.subr.mxu0 0.0
  %599 = vmatpush1.msra.mxu0 0.0
  %600 = vmatprep.subr.mxu0 0.0
  %601 = vmatpush1.msra.mxu0 0.0
  %602 = vmatprep.subr.mxu0 0.0
  %603 = vmatpush1.msra.mxu0 0.0
  %604 = vmatprep.subr.mxu0 0.0
  %605 = vmatpush1.msra.mxu0 0.0
  %606 = vmatprep.subr.mxu0 0.0
  %607 = vmatpush1.msra.mxu0 0.0
  %608 = vmatprep.subr.mxu0 0.0
  %609 = vmatpush1.msra.mxu0 0.0
  %610 = vmatprep.subr.mxu0 0.0
  %611 = vmatpush1.msra.mxu0 0.0
  %612 = vmatprep.subr.mxu0 0.0
  %613 = vmatpush1.msra.mxu0 0.0
  %614 = vmatprep.subr.mxu0 0.0
  %615 = vmatpush1.msra.mxu0 0.0
  %616 = vmatprep.mubr.f32.mxu0 0.0
  %v617 = vand.u32 %v207, 4294901760
  %v618 = vsub.f32 %v207, %v617
  %619 = vmatmul.mubr.f32.gmra.mrb[0].mxu0 %v618
  %v620 = vpop.f32.mrb[0].mxu0
  %v621 = vadd.f32 %v491, %v620
  %v622 = vpop.f32.mrb[0].mxu0
  %623 = vmatprep.mubr.f32.mxu0 0.0
  %v624 = vand.u32 %v210, 4294901760
  %v625 = vsub.f32 %v210, %v624
  %626 = vmatmul.mubr.f32.gmra.mrb[0].mxu0 %v625
  %v627 = vpop.f32.mrb[0].mxu0
  %v628 = vadd.f32 %v497, %v627
  %v629 = vpop.f32.mrb[0].mxu0
  %630 = vmatprep.mubr.f32.mxu0 0.0
  %v631 = vand.u32 %v213, 4294901760
  %v632 = vsub.f32 %v213, %v631
  %633 = vmatmul.mubr.f32.gmra.mrb[0].mxu0 %v632
  %v634 = vpop.f32.mrb[0].mxu0
  %v635 = vadd.f32 %v503, %v634
  %v636 = vpop.f32.mrb[0].mxu0
  %637 = vmatprep.mubr.f32.mxu0 0.0
  %v638 = vand.u32 %v216, 4294901760
  %v639 = vsub.f32 %v216, %v638
  %640 = vmatmul.mubr.f32.gmra.mrb[0].mxu0 %v639
  %v641 = vpop.f32.mrb[0].mxu0
  %v642 = vadd.f32 %v509, %v641
  %v643 = vpop.f32.mrb[0].mxu0
  %644 = vmatprep.mubr.f32.mxu0 0.0
  %v645 = vand.u32 %v219, 4294901760
  %v646 = vsub.f32 %v219, %v645
  %647 = vmatmul.mubr.f32.gmra.mrb[0].mxu0 %v646
  %v648 = vpop.f32.mrb[0].mxu0
  %v649 = vadd.f32 %v515, %v648
  %v650 = vpop.f32.mrb[0].mxu0
  %651 = vmatprep.mubr.f32.mxu0 0.0
  %v652 = vand.u32 %v222, 4294901760
  %v653 = vsub.f32 %v222, %v652
  %654 = vmatmul.mubr.f32.gmra.mrb[0].mxu0 %v653
  %v655 = vpop.f32.mrb[0].mxu0
  %v656 = vadd.f32 %v521, %v655
  %v657 = vpop.f32.mrb[0].mxu0
  %658 = vmatprep.mubr.f32.mxu0 0.0
  %v659 = vand.u32 %v225, 4294901760
  %v660 = vsub.f32 %v225, %v659
  %661 = vmatmul.mubr.f32.gmra.mrb[0].mxu0 %v660
  %v662 = vpop.f32.mrb[0].mxu0
  %v663 = vadd.f32 %v527, %v662
  %v664 = vpop.f32.mrb[0].mxu0
  %665 = vmatprep.mubr.f32.mxu0 0.0
  %v666 = vand.u32 %v228, 4294901760
  %v667 = vsub.f32 %v228, %v666
  %668 = vmatmul.mubr.f32.gmra.mrb[0].mxu0 %v667
  %v669 = vpop.f32.mrb[0].mxu0
  %v670 = vadd.f32 %v533, %v669
  %v671 = vpop.f32.mrb[0].mxu0
  %672 = vdwg.mxu0
  %673 = vmatprep.subr.mxu0 0.0
  %v674 = vand.u32 %v189, 4294901760
  %675 = vmatpush1.msra.mxu0 %v674
  %676 = vmatprep.subr.mxu0 0.0
  %v677 = vand.u32 %v190, 4294901760
  %678 = vmatpush1.msra.mxu0 %v677
  %679 = vmatprep.subr.mxu0 0.0
  %v680 = vand.u32 %v191, 4294901760
  %681 = vmatpush1.msra.mxu0 %v680
  %682 = vmatprep.subr.mxu0 0.0
  %v683 = vand.u32 %v192, 4294901760
  %684 = vmatpush1.msra.mxu0 %v683
  %685 = vmatprep.subr.mxu0 0.0
  %v686 = vand.u32 %v193, 4294901760
  %687 = vmatpush1.msra.mxu0 %v686
  %688 = vmatprep.subr.mxu0 0.0
  %v689 = vand.u32 %v194, 4294901760
  %690 = vmatpush1.msra.mxu0 %v689
  %691 = vmatprep.subr.mxu0 0.0
  %v692 = vand.u32 %v195, 4294901760
  %693 = vmatpush1.msra.mxu0 %v692
  %694 = vmatprep.subr.mxu0 0.0
  %v695 = vand.u32 %v196, 4294901760
  %696 = vmatpush1.msra.mxu0 %v695
  %697 = vmatprep.subr.mxu0 0.0
  %698 = vmatpush1.msra.mxu0 0.0
  %699 = vmatprep.subr.mxu0 0.0
  %700 = vmatpush1.msra.mxu0 0.0
  %701 = vmatprep.subr.mxu0 0.0
  %702 = vmatpush1.msra.mxu0 0.0
  %703 = vmatprep.subr.mxu0 0.0
  %704 = vmatpush1.msra.mxu0 0.0
  %705 = vmatprep.subr.mxu0 0.0
  %706 = vmatpush1.msra.mxu0 0.0
  %707 = vmatprep.subr.mxu0 0.0
  %708 = vmatpush1.msra.mxu0 0.0
  %709 = vmatprep.subr.mxu0 0.0
  %710 = vmatpush1.msra.mxu0 0.0
  %711 = vmatprep.subr.mxu0 0.0
  %712 = vmatpush1.msra.mxu0 0.0
  %713 = vmatprep.subr.mxu0 0.0
  %714 = vmatpush1.msra.mxu0 0.0
  %715 = vmatprep.subr.mxu0 0.0
  %716 = vmatpush1.msra.mxu0 0.0
  %717 = vmatprep.subr.mxu0 0.0
  %718 = vmatpush1.msra.mxu0 0.0
  %719 = vmatprep.subr.mxu0 0.0
  %720 = vmatpush1.msra.mxu0 0.0
  %721 = vmatprep.subr.mxu0 0.0
  %722 = vmatpush1.msra.mxu0 0.0
  %723 = vmatprep.subr.mxu0 0.0
  %724 = vmatpush1.msra.mxu0 0.0
  %725 = vmatprep.subr.mxu0 0.0
  %726 = vmatpush1.msra.mxu0 0.0
  %727 = vmatprep.subr.mxu0 0.0
  %728 = vmatpush1.msra.mxu0 0.0
  %729 = vmatprep.subr.mxu0 0.0
  %730 = vmatpush1.msra.mxu0 0.0
  %731 = vmatprep.subr.mxu0 0.0
  %732 = vmatpush1.msra.mxu0 0.0
  %733 = vmatprep.subr.mxu0 0.0
  %734 = vmatpush1.msra.mxu0 0.0
  %735 = vmatprep.subr.mxu0 0.0
  %736 = vmatpush1.msra.mxu0 0.0
  %737 = vmatprep.subr.mxu0 0.0
  %738 = vmatpush1.msra.mxu0 0.0
  %739 = vmatprep.subr.mxu0 0.0
  %740 = vmatpush1.msra.mxu0 0.0
  %741 = vmatprep.subr.mxu0 0.0
  %742 = vmatpush1.msra.mxu0 0.0
  %743 = vmatprep.subr.mxu0 0.0
  %744 = vmatpush1.msra.mxu0 0.0
  %745 = vmatprep.mubr.f32.mxu0 0.0
  %v746 = vand.u32 %v207, 4294901760
  %v747 = vsub.f32 %v207, %v746
  %v748 = vand.u32 %v747, 4294901760
  %749 = vmatmul.mubr.f32.gmra.mrb[0].mxu0 %v748
  %v750 = vpop.f32.mrb[0].mxu0
  %v751 = vadd.f32 %v621, %v750
  %v752 = vpop.f32.mrb[0].mxu0
  %753 = vmatprep.mubr.f32.mxu0 0.0
  %v754 = vand.u32 %v210, 4294901760
  %v755 = vsub.f32 %v210, %v754
  %v756 = vand.u32 %v755, 4294901760
  %757 = vmatmul.mubr.f32.gmra.mrb[0].mxu0 %v756
  %v758 = vpop.f32.mrb[0].mxu0
  %v759 = vadd.f32 %v628, %v758
  %v760 = vpop.f32.mrb[0].mxu0
  %761 = vmatprep.mubr.f32.mxu0 0.0
  %v762 = vand.u32 %v213, 4294901760
  %v763 = vsub.f32 %v213, %v762
  %v764 = vand.u32 %v763, 4294901760
  %765 = vmatmul.mubr.f32.gmra.mrb[0].mxu0 %v764
  %v766 = vpop.f32.mrb[0].mxu0
  %v767 = vadd.f32 %v635, %v766
  %v768 = vpop.f32.mrb[0].mxu0
  %769 = vmatprep.mubr.f32.mxu0 0.0
  %v770 = vand.u32 %v216, 4294901760
  %v771 = vsub.f32 %v216, %v770
  %v772 = vand.u32 %v771, 4294901760
  %773 = vmatmul.mubr.f32.gmra.mrb[0].mxu0 %v772
  %v774 = vpop.f32.mrb[0].mxu0
  %v775 = vadd.f32 %v642, %v774
  %v776 = vpop.f32.mrb[0].mxu0
  %777 = vmatprep.mubr.f32.mxu0 0.0
  %v778 = vand.u32 %v219, 4294901760
  %v779 = vsub.f32 %v219, %v778
  %v780 = vand.u32 %v779, 4294901760
  %781 = vmatmul.mubr.f32.gmra.mrb[0].mxu0 %v780
  %v782 = vpop.f32.mrb[0].mxu0
  %v783 = vadd.f32 %v649, %v782
  %v784 = vpop.f32.mrb[0].mxu0
  %785 = vmatprep.mubr.f32.mxu0 0.0
  %v786 = vand.u32 %v222, 4294901760
  %v787 = vsub.f32 %v222, %v786
  %v788 = vand.u32 %v787, 4294901760
  %789 = vmatmul.mubr.f32.gmra.mrb[0].mxu0 %v788
  %v790 = vpop.f32.mrb[0].mxu0
  %v791 = vadd.f32 %v656, %v790
  %v792 = vpop.f32.mrb[0].mxu0
  %793 = vmatprep.mubr.f32.mxu0 0.0
  %v794 = vand.u32 %v225, 4294901760
  %v795 = vsub.f32 %v225, %v794
  %v796 = vand.u32 %v795, 4294901760
  %797 = vmatmul.mubr.f32.gmra.mrb[0].mxu0 %v796
  %v798 = vpop.f32.mrb[0].mxu0
  %v799 = vadd.f32 %v663, %v798
  %v800 = vpop.f32.mrb[0].mxu0
  %801 = vmatprep.mubr.f32.mxu0 0.0
  %v802 = vand.u32 %v228, 4294901760
  %v803 = vsub.f32 %v228, %v802
  %v804 = vand.u32 %v803, 4294901760
  %805 = vmatmul.mubr.f32.gmra.mrb[0].mxu0 %v804
  %v806 = vpop.f32.mrb[0].mxu0
  %v807 = vadd.f32 %v670, %v806
  %v808 = vpop.f32.mrb[0].mxu0
  %809 = vdwg.mxu0
  %810 = vmatprep.subr.mxu0 0.0
  %v811 = vand.u32 %v189, 4294901760
  %v812 = vsub.f32 %v189, %v811
  %v813 = vand.u32 %v812, 4294901760
  %814 = vmatpush1.msra.mxu0 %v813
  %815 = vmatprep.subr.mxu0 0.0
  %v816 = vand.u32 %v190, 4294901760
  %v817 = vsub.f32 %v190, %v816
  %v818 = vand.u32 %v817, 4294901760
  %819 = vmatpush1.msra.mxu0 %v818
  %820 = vmatprep.subr.mxu0 0.0
  %v821 = vand.u32 %v191, 4294901760
  %v822 = vsub.f32 %v191, %v821
  %v823 = vand.u32 %v822, 4294901760
  %824 = vmatpush1.msra.mxu0 %v823
  %825 = vmatprep.subr.mxu0 0.0
  %v826 = vand.u32 %v192, 4294901760
  %v827 = vsub.f32 %v192, %v826
  %v828 = vand.u32 %v827, 4294901760
  %829 = vmatpush1.msra.mxu0 %v828
  %830 = vmatprep.subr.mxu0 0.0
  %v831 = vand.u32 %v193, 4294901760
  %v832 = vsub.f32 %v193, %v831
  %v833 = vand.u32 %v832, 4294901760
  %834 = vmatpush1.msra.mxu0 %v833
  %835 = vmatprep.subr.mxu0 0.0
  %v836 = vand.u32 %v194, 4294901760
  %v837 = vsub.f32 %v194, %v836
  %v838 = vand.u32 %v837, 4294901760
  %839 = vmatpush1.msra.mxu0 %v838
  %840 = vmatprep.subr.mxu0 0.0
  %v841 = vand.u32 %v195, 4294901760
  %v842 = vsub.f32 %v195, %v841
  %v843 = vand.u32 %v842, 4294901760
  %844 = vmatpush1.msra.mxu0 %v843
  %845 = vmatprep.subr.mxu0 0.0
  %v846 = vand.u32 %v196, 4294901760
  %v847 = vsub.f32 %v196, %v846
  %v848 = vand.u32 %v847, 4294901760
  %849 = vmatpush1.msra.mxu0 %v848
  %850 = vmatprep.subr.mxu0 0.0
  %851 = vmatpush1.msra.mxu0 0.0
  %852 = vmatprep.subr.mxu0 0.0
  %853 = vmatpush1.msra.mxu0 0.0
  %854 = vmatprep.subr.mxu0 0.0
  %855 = vmatpush1.msra.mxu0 0.0
  %856 = vmatprep.subr.mxu0 0.0
  %857 = vmatpush1.msra.mxu0 0.0
  %858 = vmatprep.subr.mxu0 0.0
  %859 = vmatpush1.msra.mxu0 0.0
  %860 = vmatprep.subr.mxu0 0.0
  %861 = vmatpush1.msra.mxu0 0.0
  %862 = vmatprep.subr.mxu0 0.0
  %863 = vmatpush1.msra.mxu0 0.0
  %864 = vmatprep.subr.mxu0 0.0
  %865 = vmatpush1.msra.mxu0 0.0
  %866 = vmatprep.subr.mxu0 0.0
  %867 = vmatpush1.msra.mxu0 0.0
  %868 = vmatprep.subr.mxu0 0.0
  %869 = vmatpush1.msra.mxu0 0.0
  %870 = vmatprep.subr.mxu0 0.0
  %871 = vmatpush1.msra.mxu0 0.0
  %872 = vmatprep.subr.mxu0 0.0
  %873 = vmatpush1.msra.mxu0 0.0
  %874 = vmatprep.subr.mxu0 0.0
  %875 = vmatpush1.msra.mxu0 0.0
  %876 = vmatprep.subr.mxu0 0.0
  %877 = vmatpush1.msra.mxu0 0.0
  %878 = vmatprep.subr.mxu0 0.0
  %879 = vmatpush1.msra.mxu0 0.0
  %880 = vmatprep.subr.mxu0 0.0
  %881 = vmatpush1.msra.mxu0 0.0
  %882 = vmatprep.subr.mxu0 0.0
  %883 = vmatpush1.msra.mxu0 0.0
  %884 = vmatprep.subr.mxu0 0.0
  %885 = vmatpush1.msra.mxu0 0.0
  %886 = vmatprep.subr.mxu0 0.0
  %887 = vmatpush1.msra.mxu0 0.0
  %888 = vmatprep.subr.mxu0 0.0
  %889 = vmatpush1.msra.mxu0 0.0
  %890 = vmatprep.subr.mxu0 0.0
  %891 = vmatpush1.msra.mxu0 0.0
  %892 = vmatprep.subr.mxu0 0.0
  %893 = vmatpush1.msra.mxu0 0.0
  %894 = vmatprep.subr.mxu0 0.0
  %895 = vmatpush1.msra.mxu0 0.0
  %896 = vmatprep.subr.mxu0 0.0
  %897 = vmatpush1.msra.mxu0 0.0
  %898 = vmatprep.mubr.f32.mxu0 0.0
  %v899 = vand.u32 %v207, 4294901760
  %900 = vmatmul.mubr.f32.gmra.mrb[0].mxu0 %v899
  %v901 = vpop.f32.mrb[0].mxu0
  %v902 = vadd.f32 %v751, %v901
  %v903 = vpop.f32.mrb[0].mxu0
  %904 = vmatprep.mubr.f32.mxu0 0.0
  %v905 = vand.u32 %v210, 4294901760
  %906 = vmatmul.mubr.f32.gmra.mrb[0].mxu0 %v905
  %v907 = vpop.f32.mrb[0].mxu0
  %v908 = vadd.f32 %v759, %v907
  %v909 = vpop.f32.mrb[0].mxu0
  %910 = vmatprep.mubr.f32.mxu0 0.0
  %v911 = vand.u32 %v213, 4294901760
  %912 = vmatmul.mubr.f32.gmra.mrb[0].mxu0 %v911
  %v913 = vpop.f32.mrb[0].mxu0
  %v914 = vadd.f32 %v767, %v913
  %v915 = vpop.f32.mrb[0].mxu0
  %916 = vmatprep.mubr.f32.mxu0 0.0
  %v917 = vand.u32 %v216, 4294901760
  %918 = vmatmul.mubr.f32.gmra.mrb[0].mxu0 %v917
  %v919 = vpop.f32.mrb[0].mxu0
  %v920 = vadd.f32 %v775, %v919
  %v921 = vpop.f32.mrb[0].mxu0
  %922 = vmatprep.mubr.f32.mxu0 0.0
  %v923 = vand.u32 %v219, 4294901760
  %924 = vmatmul.mubr.f32.gmra.mrb[0].mxu0 %v923
  %v925 = vpop.f32.mrb[0].mxu0
  %v926 = vadd.f32 %v783, %v925
  %v927 = vpop.f32.mrb[0].mxu0
  %928 = vmatprep.mubr.f32.mxu0 0.0
  %v929 = vand.u32 %v222, 4294901760
  %930 = vmatmul.mubr.f32.gmra.mrb[0].mxu0 %v929
  %v931 = vpop.f32.mrb[0].mxu0
  %v932 = vadd.f32 %v791, %v931
  %v933 = vpop.f32.mrb[0].mxu0
  %934 = vmatprep.mubr.f32.mxu0 0.0
  %v935 = vand.u32 %v225, 4294901760
  %936 = vmatmul.mubr.f32.gmra.mrb[0].mxu0 %v935
  %v937 = vpop.f32.mrb[0].mxu0
  %v938 = vadd.f32 %v799, %v937
  %v939 = vpop.f32.mrb[0].mxu0
  %940 = vmatprep.mubr.f32.mxu0 0.0
  %v941 = vand.u32 %v228, 4294901760
  %942 = vmatmul.mubr.f32.gmra.mrb[0].mxu0 %v941
  %v943 = vpop.f32.mrb[0].mxu0
  %v944 = vadd.f32 %v807, %v943
  %v945 = vpop.f32.mrb[0].mxu0
  %946 = vdwg.mxu0
  %947 = vmatprep.subr.mxu0 0.0
  %v948 = vand.u32 %v189, 4294901760
  %949 = vmatpush1.msra.mxu0 %v948
  %950 = vmatprep.subr.mxu0 0.0
  %v951 = vand.u32 %v190, 4294901760
  %952 = vmatpush1.msra.mxu0 %v951
  %953 = vmatprep.subr.mxu0 0.0
  %v954 = vand.u32 %v191, 4294901760
  %955 = vmatpush1.msra.mxu0 %v954
  %956 = vmatprep.subr.mxu0 0.0
  %v957 = vand.u32 %v192, 4294901760
  %958 = vmatpush1.msra.mxu0 %v957
  %959 = vmatprep.subr.mxu0 0.0
  %v960 = vand.u32 %v193, 4294901760
  %961 = vmatpush1.msra.mxu0 %v960
  %962 = vmatprep.subr.mxu0 0.0
  %v963 = vand.u32 %v194, 4294901760
  %964 = vmatpush1.msra.mxu0 %v963
  %965 = vmatprep.subr.mxu0 0.0
  %v966 = vand.u32 %v195, 4294901760
  %967 = vmatpush1.msra.mxu0 %v966
  %968 = vmatprep.subr.mxu0 0.0
  %v969 = vand.u32 %v196, 4294901760
  %970 = vmatpush1.msra.mxu0 %v969
  %971 = vmatprep.subr.mxu0 0.0
  %972 = vmatpush1.msra.mxu0 0.0
  %973 = vmatprep.subr.mxu0 0.0
  %974 = vmatpush1.msra.mxu0 0.0
  %975 = vmatprep.subr.mxu0 0.0
  %976 = vmatpush1.msra.mxu0 0.0
  %977 = vmatprep.subr.mxu0 0.0
  %978 = vmatpush1.msra.mxu0 0.0
  %979 = vmatprep.subr.mxu0 0.0
  %980 = vmatpush1.msra.mxu0 0.0
  %981 = vmatprep.subr.mxu0 0.0
  %982 = vmatpush1.msra.mxu0 0.0
  %983 = vmatprep.subr.mxu0 0.0
  %984 = vmatpush1.msra.mxu0 0.0
  %985 = vmatprep.subr.mxu0 0.0
  %986 = vmatpush1.msra.mxu0 0.0
  %987 = vmatprep.subr.mxu0 0.0
  %988 = vmatpush1.msra.mxu0 0.0
  %989 = vmatprep.subr.mxu0 0.0
  %990 = vmatpush1.msra.mxu0 0.0
  %991 = vmatprep.subr.mxu0 0.0
  %992 = vmatpush1.msra.mxu0 0.0
  %993 = vmatprep.subr.mxu0 0.0
  %994 = vmatpush1.msra.mxu0 0.0
  %995 = vmatprep.subr.mxu0 0.0
  %996 = vmatpush1.msra.mxu0 0.0
  %997 = vmatprep.subr.mxu0 0.0
  %998 = vmatpush1.msra.mxu0 0.0
  %999 = vmatprep.subr.mxu0 0.0
  %1000 = vmatpush1.msra.mxu0 0.0
  %1001 = vmatprep.subr.mxu0 0.0
  %1002 = vmatpush1.msra.mxu0 0.0
  %1003 = vmatprep.subr.mxu0 0.0
  %1004 = vmatpush1.msra.mxu0 0.0
  %1005 = vmatprep.subr.mxu0 0.0
  %1006 = vmatpush1.msra.mxu0 0.0
  %1007 = vmatprep.subr.mxu0 0.0
  %1008 = vmatpush1.msra.mxu0 0.0
  %1009 = vmatprep.subr.mxu0 0.0
  %1010 = vmatpush1.msra.mxu0 0.0
  %1011 = vmatprep.subr.mxu0 0.0
  %1012 = vmatpush1.msra.mxu0 0.0
  %1013 = vmatprep.subr.mxu0 0.0
  %1014 = vmatpush1.msra.mxu0 0.0
  %1015 = vmatprep.subr.mxu0 0.0
  %1016 = vmatpush1.msra.mxu0 0.0
  %1017 = vmatprep.subr.mxu0 0.0
  %1018 = vmatpush1.msra.mxu0 0.0
  %1019 = vmatprep.mubr.f32.mxu0 0.0
  %v1020 = vand.u32 %v207, 4294901760
  %1021 = vmatmul.mubr.f32.gmra.mrb[0].mxu0 %v1020
  %v1022 = vpop.f32.mrb[0].mxu0
  %v1023 = vadd.f32 %v902, %v1022
  %v1024 = vpop.f32.mrb[0].mxu0
  %1025 = vmatprep.mubr.f32.mxu0 0.0
  %v1026 = vand.u32 %v210, 4294901760
  %1027 = vmatmul.mubr.f32.gmra.mrb[0].mxu0 %v1026
  %v1028 = vpop.f32.mrb[0].mxu0
  %v1029 = vadd.f32 %v908, %v1028
  %v1030 = vpop.f32.mrb[0].mxu0
  %1031 = vmatprep.mubr.f32.mxu0 0.0
  %v1032 = vand.u32 %v213, 4294901760
  %1033 = vmatmul.mubr.f32.gmra.mrb[0].mxu0 %v1032
  %v1034 = vpop.f32.mrb[0].mxu0
  %v1035 = vadd.f32 %v914, %v1034
  %v1036 = vpop.f32.mrb[0].mxu0
  %1037 = vmatprep.mubr.f32.mxu0 0.0
  %v1038 = vand.u32 %v216, 4294901760
  %1039 = vmatmul.mubr.f32.gmra.mrb[0].mxu0 %v1038
  %v1040 = vpop.f32.mrb[0].mxu0
  %v1041 = vadd.f32 %v920, %v1040
  %v1042 = vpop.f32.mrb[0].mxu0
  %1043 = vmatprep.mubr.f32.mxu0 0.0
  %v1044 = vand.u32 %v219, 4294901760
  %1045 = vmatmul.mubr.f32.gmra.mrb[0].mxu0 %v1044
  %v1046 = vpop.f32.mrb[0].mxu0
  %v1047 = vadd.f32 %v926, %v1046
  %v1048 = vpop.f32.mrb[0].mxu0
  %1049 = vmatprep.mubr.f32.mxu0 0.0
  %v1050 = vand.u32 %v222, 4294901760
  %1051 = vmatmul.mubr.f32.gmra.mrb[0].mxu0 %v1050
  %v1052 = vpop.f32.mrb[0].mxu0
  %v1053 = vadd.f32 %v932, %v1052
  %v1054 = vpop.f32.mrb[0].mxu0
  %1055 = vmatprep.mubr.f32.mxu0 0.0
  %v1056 = vand.u32 %v225, 4294901760
  %1057 = vmatmul.mubr.f32.gmra.mrb[0].mxu0 %v1056
  %v1058 = vpop.f32.mrb[0].mxu0
  %v1059 = vadd.f32 %v938, %v1058
  %v1060 = vpop.f32.mrb[0].mxu0
  %1061 = vmatprep.mubr.f32.mxu0 0.0
  %v1062 = vand.u32 %v228, 4294901760
  %1063 = vmatmul.mubr.f32.gmra.mrb[0].mxu0 %v1062
  %v1064 = vpop.f32.mrb[0].mxu0
  %v1065 = vadd.f32 %v944, %v1064
  %v1066 = vpop.f32.mrb[0].mxu0
  %1067 = vdwg.mxu0
  %v1068 = vmax.f32 %v1023, 0.0
  %v1069 = vmax.f32 %v1029, 0.0
  %v1070 = vmax.f32 %v1035, 0.0
  %v1071 = vmax.f32 %v1041, 0.0
  %v1072 = vmax.f32 %v1047, 0.0
  %v1073 = vmax.f32 %v1053, 0.0
  %v1074 = vmax.f32 %v1059, 0.0
  %v1075 = vmax.f32 %v1065, 0.0
  %v1076 = vld [vmem:[%s4] sm:$0xff]
  %v1077 = vld [vmem:[%s4 + $0x8] sm:$0xff]
  %v1078 = vld [vmem:[%s4 + $0x10] sm:$0xff]
  %v1079 = vld [vmem:[%s4 + $0x18] sm:$0xff]
  %v1080 = vld [vmem:[%s4 + $0x20] sm:$0xff]
  %v1081 = vld [vmem:[%s4 + $0x28] sm:$0xff]
  %v1082 = vld [vmem:[%s4 + $0x30] sm:$0xff]
  %v1083 = vld [vmem:[%s4 + $0x38] sm:$0xff]
  %1085 = vset.pattern.permute.xlu0 0
  %1086 = vperm.xlu0 %1085, %v1076
  %v1087 = vpop.permute.xlu0 %1086
  %1090 = vset.pattern.permute.xlu0 0
  %1091 = vperm.xlu0 %1090, %v1077
  %v1092 = vpop.permute.xlu0 %1091
  %1095 = vset.pattern.permute.xlu0 0
  %1096 = vperm.xlu0 %1095, %v1078
  %v1097 = vpop.permute.xlu0 %1096
  %1100 = vset.pattern.permute.xlu0 0
  %1101 = vperm.xlu0 %1100, %v1079
  %v1102 = vpop.permute.xlu0 %1101
  %1105 = vset.pattern.permute.xlu0 0
  %1106 = vperm.xlu0 %1105, %v1080
  %v1107 = vpop.permute.xlu0 %1106
  %1110 = vset.pattern.permute.xlu0 0
  %1111 = vperm.xlu0 %1110, %v1081
  %v1112 = vpop.permute.xlu0 %1111
  %1115 = vset.pattern.permute.xlu0 0
  %1116 = vperm.xlu0 %1115, %v1082
  %v1117 = vpop.permute.xlu0 %1116
  %1120 = vset.pattern.permute.xlu0 0
  %1121 = vperm.xlu0 %1120, %v1083
  %v1122 = vpop.permute.xlu0 %1121
  %v1124 = vmul.f32 %v1068, %v1087
  %v1125 = vmul.f32 %v1069, %v1092
  %v1126 = vmul.f32 %v1070, %v1097
  %v1127 = vmul.f32 %v1071, %v1102
  %v1128 = vmul.f32 %v1072, %v1107
  %v1129 = vmul.f32 %v1073, %v1112
  %v1130 = vmul.f32 %v1074, %v1117
  %v1131 = vmul.f32 %v1075, %v1122
  %v1132 = vadd.f32 %v1124, %v1125
  %v1133 = vadd.f32 %v1132, %v1126
  %v1134 = vadd.f32 %v1133, %v1127
  %v1135 = vadd.f32 %v1134, %v1128
  %v1136 = vadd.f32 %v1135, %v1129
  %v1137 = vadd.f32 %v1136, %v1130
  %v1138 = vadd.f32 %v1137, %v1131
  %v1139 = vrot.slane %v1138, 4
  %v1140 = vadd.f32 %v1138, %v1139
  %v1141 = vrot.slane %v1140, 2
  %v1142 = vadd.f32 %v1140, %v1141
  %v1143 = vrot.slane %v1142, 1
  %v1144 = vadd.f32 %v1142, %v1143
  %1145 = vset.pattern.permute.xlu0 1
  %1146 = vperm.xlu0 %1145, %v1076
  %v1147 = vpop.permute.xlu0 %1146
  %1149 = vset.pattern.permute.xlu0 1
  %1150 = vperm.xlu0 %1149, %v1077
  %v1151 = vpop.permute.xlu0 %1150
  %1153 = vset.pattern.permute.xlu0 1
  %1154 = vperm.xlu0 %1153, %v1078
  %v1155 = vpop.permute.xlu0 %1154
  %1157 = vset.pattern.permute.xlu0 1
  %1158 = vperm.xlu0 %1157, %v1079
  %v1159 = vpop.permute.xlu0 %1158
  %1161 = vset.pattern.permute.xlu0 1
  %1162 = vperm.xlu0 %1161, %v1080
  %v1163 = vpop.permute.xlu0 %1162
  %1165 = vset.pattern.permute.xlu0 1
  %1166 = vperm.xlu0 %1165, %v1081
  %v1167 = vpop.permute.xlu0 %1166
  %1169 = vset.pattern.permute.xlu0 1
  %1170 = vperm.xlu0 %1169, %v1082
  %v1171 = vpop.permute.xlu0 %1170
  %1173 = vset.pattern.permute.xlu0 1
  %1174 = vperm.xlu0 %1173, %v1083
  %v1175 = vpop.permute.xlu0 %1174
  %v1177 = vmul.f32 %v1068, %v1147
  %v1178 = vmul.f32 %v1069, %v1151
  %v1179 = vmul.f32 %v1070, %v1155
  %v1180 = vmul.f32 %v1071, %v1159
  %v1181 = vmul.f32 %v1072, %v1163
  %v1182 = vmul.f32 %v1073, %v1167
  %v1183 = vmul.f32 %v1074, %v1171
  %v1184 = vmul.f32 %v1075, %v1175
  %v1185 = vadd.f32 %v1177, %v1178
  %v1186 = vadd.f32 %v1185, %v1179
  %v1187 = vadd.f32 %v1186, %v1180
  %v1188 = vadd.f32 %v1187, %v1181
  %v1189 = vadd.f32 %v1188, %v1182
  %v1190 = vadd.f32 %v1189, %v1183
  %v1191 = vadd.f32 %v1190, %v1184
  %v1192 = vrot.slane %v1191, 4
  %v1193 = vadd.f32 %v1191, %v1192
  %v1194 = vrot.slane %v1193, 2
  %v1195 = vadd.f32 %v1193, %v1194
  %v1196 = vrot.slane %v1195, 1
  %v1197 = vadd.f32 %v1195, %v1196
  %vm1198 = vcmask 1040384
  %v1199 = vsel %vm1198, %v1144, %v1197
  %1200 = vst [vmem:[%s5] sm:$0x3] %v1199
  // Predicated region
  $region22: #{_forward_impl.1} parent=0 // pred_check
    _
  $region23: #{_forward_impl.1} parent=0 // pred_check_branch
    %1202 = sbr.rel (0) target = $region25
  $region24: #{_forward_impl.1} parent=0 // pred_region
    _
  $region25: #{_forward_impl.1} parent=0 // pred_fallthru
    _
  // Predicated region
  $region26: #{_forward_impl.1} parent=0 // pred_check
    _
  $region27: #{_forward_impl.1} parent=0 // pred_check_branch
    %1204 = sbr.rel (0) target = $region29
  $region28: #{_forward_impl.1} parent=0 // pred_region
    _
  $region29: #{_forward_impl.1} parent=0 // pred_fallthru
    _

</llo_original>
